<compile_context>
chip_gen: v7x
topology: tpu7x:2x2x1
jax: 0.10.0
libtpu: 0.0.40
codegen_flags: <defaults>
</compile_context>

<pallas_src>
import jax
import jax.numpy as jnp
from jax.experimental import pallas as pl
from jax.experimental.pallas import tpu as pltpu


# Packed parameter slab layout (PARAM_ROWS x 128 lanes, float32):
#   rows   0: 64, cols 0:  4  -> W1 (64, 4)    fc1 weight (out, in)
#   rows   0: 64, col  4      -> b1 (64,)
#   rows  64:192, cols 0: 64  -> W2 (128, 64)  fc2 weight
#   rows  64:192, col  64     -> b2 (128,)
#   rows 192:195, cols 0:128  -> W3 (3, 128)   fc3 weight
#   rows 200:203, col  0      -> b3 (3,)
PARAM_ROWS = 208


def iris_mlp_kernel(xT_ref, p_ref, oT_ref):
    xT = xT_ref[...]                        # (4, TILE_B)  batch on lanes
    w1 = p_ref[0:64, 0:4]                   # (64, 4)
    b1 = p_ref[0:64, 4:5]                   # (64, 1)
    w2 = p_ref[64:192, 0:64]                # (128, 64)
    b2 = p_ref[64:192, 64:65]               # (128, 1)
    w3 = p_ref[192:195, 0:128]              # (3, 128)
    b3 = p_ref[200:203, 0:1]                # (3, 1)

    # Layer 1: contraction dim is only 4 -> keep it off the MXU, 4 broadcast
    # multiply-adds on the VPU (f32).
    h1 = w1[:, 0:1] * xT[0:1, :] + b1       # (64, TILE_B)
    for k in range(1, 4):
        h1 = h1 + w1[:, k:k + 1] * xT[k:k + 1, :]
    h1 = jnp.maximum(h1, 0.0)

    # Layers 2/3 on the MXU, fully lane-dense activations.
    h2 = jnp.dot(w2, h1, preferred_element_type=jnp.float32) + b2   # (128, TILE_B)
    h2 = jnp.maximum(h2, 0.0)
    yT = jnp.dot(w3, h2, preferred_element_type=jnp.float32) + b3   # (3, TILE_B)

    oT_ref[...] = yT.astype(oT_ref.dtype)


def pack_params(params):
    """Pack all weights/biases into a single (PARAM_ROWS, 128) f32 slab."""
    w1, b1, w2, b2, w3, b3 = params         # PyTorch orientation: W (out,in), b (out,)
    slab = jnp.zeros((PARAM_ROWS, 128), jnp.float32)
    slab = slab.at[0:64, 0:4].set(w1)
    slab = slab.at[0:64, 4].set(b1)
    slab = slab.at[64:192, 0:64].set(w2)
    slab = slab.at[64:192, 64].set(b2)
    slab = slab.at[192:195, 0:128].set(w3)
    slab = slab.at[200:203, 0].set(b3)
    return slab


def iris_forward(x, param_slab, *, tile_b=2048):
    """x: (B, 4) f32 -> logits (B, 3) f32."""
    B = x.shape[0]
    # Batch lives on the lane axis: tile must be a multiple of 128 and the
    # batch is padded up to a multiple of the tile. TILE_B <= 2048 keeps the
    # per-step VMEM footprint (~<2 MiB incl. double-buffering) far under the
    # v7x 32 MiB scoped limit while staying big enough to amortize step cost.
    tile_b = max(128, (int(tile_b) // 128) * 128)
    tile_b = min(tile_b, max(128, pl.cdiv(B, 128) * 128))
    bp = pl.cdiv(B, tile_b) * tile_b
    grid = (bp // tile_b,)

    xT = jnp.pad(x, ((0, bp - B), (0, 0))).T            # (4, Bp), lane-dense

    cost = pl.CostEstimate(
        flops=2 * B * (4 * 64 + 64 * 128 + 128 * 3),
        transcendentals=0,
        bytes_accessed=B * (4 + 3) * 4 + PARAM_ROWS * 128 * 4,
    )

    oT = pl.pallas_call(
        iris_mlp_kernel,
        out_shape=jax.ShapeDtypeStruct((3, bp), jnp.float32),
        grid=grid,
        in_specs=[
            # x^T tile: pipelined across the batch grid.
            pl.BlockSpec((4, tile_b), lambda i: (0, i)),
            # Packed params: constant block index -> DMA'd once, VMEM-resident.
            pl.BlockSpec((PARAM_ROWS, 128), lambda i: (0, 0)),
        ],
        # Lane-dense output tile (3, TILE_B).
        out_specs=pl.BlockSpec((3, tile_b), lambda i: (0, i)),
        compiler_params=pltpu.CompilerParams(
            dimension_semantics=("parallel",),   # shards batch across TCs on v7x
        ),
        cost_estimate=cost,
    )(xT, param_slab)

    return oT.T[:B, :]                                   # back to (B, 3)


def init_params(key):
    # Deterministic init mimicking PyTorch's default nn.Linear init
    # (uniform(-1/sqrt(fan_in), 1/sqrt(fan_in))), PyTorch orientation.
    def linear(key, fan_in, fan_out):
        kw, kb = jax.random.split(key)
        bound = 1.0 / float(fan_in) ** 0.5
        w = jax.random.uniform(kw, (fan_out, fan_in), jnp.float32, -bound, bound)
        b = jax.random.uniform(kb, (fan_out,), jnp.float32, -bound, bound)
        return w, b

    k1, k2, k3 = jax.random.split(key, 3)
    w1, b1 = linear(k1, 4, 64)
    w2, b2 = linear(k2, 64, 128)
    w3, b3 = linear(k3, 128, 3)
    return (w1, b1, w2, b2, w3, b3)


def reference_forward(x, params):
    w1, b1, w2, b2, w3, b3 = params
    h1 = jnp.maximum(x @ w1.T + b1, 0.0)
    h2 = jnp.maximum(h1 @ w2.T + b2, 0.0)
    return h2 @ w3.T + b3


if __name__ == "__main__":
    key = jax.random.PRNGKey(0)
    kp, kx = jax.random.split(key)
    params = init_params(kp)
    slab = pack_params(params)

    B = 8  # iris features = 4, small batch
    x = jax.random.normal(kx, (B, 4), jnp.float32)

    out = iris_forward(x, slab)
    out = jax.block_until_ready(out)

    ref = reference_forward(x, params)
    assert out.shape == (B, 3)
    assert jnp.allclose(out, ref, atol=1e-4, rtol=1e-4), "mismatch vs reference"
    print("KERNEL_OK")
</pallas_src>

<mosaic_0001>
module attributes {stable_mosaic.version = 11 : i64} {
  func.func @iris_mlp_kernel(%arg0: i32, %arg1: memref<4x128xf32, #tpu.memory_space<vmem>>, %arg2: memref<208x128xf32, #tpu.memory_space<vmem>>, %arg3: memref<3x128xf32, #tpu.memory_space<vmem>>) attributes {dimension_semantics = [#tpu.dimension_semantics<parallel>], iteration_bounds = array<i64: 1>, scalar_prefetch = 0 : i64, scratch_operands = 0 : i64, tpu.core_type = #tpu.core_type<tc>, window_params = [{transform_indices = @transform_0, window_bounds = array<i64: 4, 128>}, {pipeline_mode = #tpu.pipeline_mode<synchronous>, transform_indices = @transform_1, window_bounds = array<i64: 208, 128>}, {transform_indices = @transform_2, window_bounds = array<i64: 3, 128>}]} {
    %c0 = arith.constant 0 : index
    %c0_0 = arith.constant 0 : index
    %0 = vector.load %arg1[%c0, %c0_0] : memref<4x128xf32, #tpu.memory_space<vmem>>, vector<4x128xf32>
    %c0_1 = arith.constant 0 : index
    %c0_2 = arith.constant 0 : index
    %1 = vector.load %arg2[%c0_1, %c0_2] : memref<208x128xf32, #tpu.memory_space<vmem>>, vector<64x4xf32>
    %c0_3 = arith.constant 0 : index
    %c4 = arith.constant 4 : index
    %2 = vector.load %arg2[%c0_3, %c4] : memref<208x128xf32, #tpu.memory_space<vmem>>, vector<64x1xf32>
    %c64 = arith.constant 64 : index
    %c0_4 = arith.constant 0 : index
    %3 = vector.load %arg2[%c64, %c0_4] : memref<208x128xf32, #tpu.memory_space<vmem>>, vector<128x64xf32>
    %c64_5 = arith.constant 64 : index
    %c64_6 = arith.constant 64 : index
    %4 = vector.load %arg2[%c64_5, %c64_6] : memref<208x128xf32, #tpu.memory_space<vmem>>, vector<128x1xf32>
    %c192 = arith.constant 192 : index
    %c0_7 = arith.constant 0 : index
    %5 = vector.load %arg2[%c192, %c0_7] : memref<208x128xf32, #tpu.memory_space<vmem>>, vector<3x128xf32>
    %c200 = arith.constant 200 : index
    %c0_8 = arith.constant 0 : index
    %6 = vector.load %arg2[%c200, %c0_8] : memref<208x128xf32, #tpu.memory_space<vmem>>, vector<3x1xf32>
    %7 = vector.extract_strided_slice %1 {offsets = [0, 0], sizes = [64, 1], strides = [1, 1]} : vector<64x4xf32> to vector<64x1xf32>
    %8 = vector.extract_strided_slice %0 {offsets = [0, 0], sizes = [1, 128], strides = [1, 1]} : vector<4x128xf32> to vector<1x128xf32>
    %9 = vector.broadcast %7 : vector<64x1xf32> to vector<64x128xf32>
    %10 = vector.broadcast %8 : vector<1x128xf32> to vector<64x128xf32>
    %11 = arith.mulf %9, %10 : vector<64x128xf32>
    %12 = vector.broadcast %2 : vector<64x1xf32> to vector<64x128xf32>
    %13 = arith.addf %11, %12 : vector<64x128xf32>
    %14 = vector.extract_strided_slice %1 {offsets = [0, 1], sizes = [64, 1], strides = [1, 1]} : vector<64x4xf32> to vector<64x1xf32>
    %15 = vector.extract_strided_slice %0 {offsets = [1, 0], sizes = [1, 128], strides = [1, 1]} : vector<4x128xf32> to vector<1x128xf32>
    %16 = vector.broadcast %14 : vector<64x1xf32> to vector<64x128xf32>
    %17 = vector.broadcast %15 : vector<1x128xf32> to vector<64x128xf32>
    %18 = arith.mulf %16, %17 : vector<64x128xf32>
    %19 = arith.addf %13, %18 : vector<64x128xf32>
    %20 = vector.extract_strided_slice %1 {offsets = [0, 2], sizes = [64, 1], strides = [1, 1]} : vector<64x4xf32> to vector<64x1xf32>
    %21 = vector.extract_strided_slice %0 {offsets = [2, 0], sizes = [1, 128], strides = [1, 1]} : vector<4x128xf32> to vector<1x128xf32>
    %22 = vector.broadcast %20 : vector<64x1xf32> to vector<64x128xf32>
    %23 = vector.broadcast %21 : vector<1x128xf32> to vector<64x128xf32>
    %24 = arith.mulf %22, %23 : vector<64x128xf32>
    %25 = arith.addf %19, %24 : vector<64x128xf32>
    %26 = vector.extract_strided_slice %1 {offsets = [0, 3], sizes = [64, 1], strides = [1, 1]} : vector<64x4xf32> to vector<64x1xf32>
    %27 = vector.extract_strided_slice %0 {offsets = [3, 0], sizes = [1, 128], strides = [1, 1]} : vector<4x128xf32> to vector<1x128xf32>
    %28 = vector.broadcast %26 : vector<64x1xf32> to vector<64x128xf32>
    %29 = vector.broadcast %27 : vector<1x128xf32> to vector<64x128xf32>
    %30 = arith.mulf %28, %29 : vector<64x128xf32>
    %31 = arith.addf %25, %30 : vector<64x128xf32>
    %cst = arith.constant 0.000000e+00 : f32
    %32 = vector.broadcast %cst : f32 to vector<64x128xf32>
    %33 = arith.maximumf %31, %32 : vector<64x128xf32>
    %cst_9 = arith.constant dense<0.000000e+00> : vector<128x128xf32>
    %34 = tpu.matmul %3, %33, %cst_9 {dimension_numbers = #tpu.dot_dimension_numbers<[1], [0], [0], [1], [0, 0, 1, 1], [], []>} : vector<128x64xf32>, vector<64x128xf32>, vector<128x128xf32> -> vector<128x128xf32>
    %35 = vector.broadcast %4 : vector<128x1xf32> to vector<128x128xf32>
    %36 = arith.addf %34, %35 : vector<128x128xf32>
    %cst_10 = arith.constant 0.000000e+00 : f32
    %37 = vector.broadcast %cst_10 : f32 to vector<128x128xf32>
    %38 = arith.maximumf %36, %37 : vector<128x128xf32>
    %cst_11 = arith.constant dense<0.000000e+00> : vector<3x128xf32>
    %39 = tpu.matmul %5, %38, %cst_11 {dimension_numbers = #tpu.dot_dimension_numbers<[1], [0], [0], [1], [0, 0, 1, 1], [], []>} : vector<3x128xf32>, vector<128x128xf32>, vector<3x128xf32> -> vector<3x128xf32>
    %40 = vector.broadcast %6 : vector<3x1xf32> to vector<3x128xf32>
    %41 = arith.addf %39, %40 : vector<3x128xf32>
    %c0_12 = arith.constant 0 : index
    %c0_13 = arith.constant 0 : index
    %42 = vector.load %arg3[%c0_12, %c0_13] : memref<3x128xf32, #tpu.memory_space<vmem>>, vector<3x128xf32>
    tpu.vector_store %arg3[%c0_12, %c0_13], %41 {strides = array<i32>} : memref<3x128xf32, #tpu.memory_space<vmem>>, vector<3x128xf32>,
    return
  }
  func.func @transform_0(%arg0: i32) -> (i32, i32) {
    %c0_i32 = arith.constant 0 : i32
    %c0_i32_0 = arith.constant 0 : i32
    return %c0_i32, %arg0 : i32, i32
  }
  func.func @transform_1(%arg0: i32) -> (i32, i32) {
    %c0_i32 = arith.constant 0 : i32
    %c0_i32_0 = arith.constant 0 : i32
    %c0_i32_1 = arith.constant 0 : i32
    return %c0_i32, %c0_i32_0 : i32, i32
  }
  func.func @transform_2(%arg0: i32) -> (i32, i32) {
    %c0_i32 = arith.constant 0 : i32
    %c0_i32_0 = arith.constant 0 : i32
    return %c0_i32, %arg0 : i32, i32
  }
}

</mosaic_0001>

<llo_original>
// kernel: tpu_custom_call.1
$region0: #{tpu_custom_call.1}
  #allocation0 [shape = 'u32[]', space=smem, size = 0x4, offset = 0x4, fixed_abs, tag = 'smem constant byte address 0x4 - core index']
  #allocation1 [shape = 'u32[144,128]{1,0:T(1,128)}', space=vmem, size = 0x12000, scoped, tag = 'internal scratch']
  %s0 = inlined_call_operand.hbm [shape: f32[4,128], index: 0, kind: input, shape index: {}]
  %s1 = inlined_call_operand.hbm [shape: f32[208,128], index: 1, kind: input, shape index: {}]
  %s2 = inlined_call_operand.hbm [shape: f32[3,128], index: 2, kind: output, shape index: {}]
  %s3 = sld [smem:[#allocation0]]
  $region26: #{tpu_custom_call.1} parent=0
    _
  %s5 = ssub.s32 1, %s3
  %s6 = scalar_select 0, %s5, %s3
  $region1: #{tpu_custom_call.1} parent=0
    #allocation2 [shape = 'u8[2048]{0}', space=vmem, size = 0x800, scoped, tag = 'input window, operand 0, single buffered']
    #allocation3 [shape = 's32[1]{0}', space=sflag, size = 0x4, scoped, tag = 'scoped memory for tpu_custom_call.1']
    #allocation4 [shape = 's32[1]{0}', space=sflag, size = 0x4, scoped, tag = 'scoped memory for tpu_custom_call.1']
    #allocation5 [shape = 'u8[106496]{0}', space=vmem, size = 0x1a000, scoped, tag = 'input window, operand 1, single buffered']
    #allocation6 [shape = 's32[1]{0}', space=sflag, size = 0x4, scoped, tag = 'scoped memory for tpu_custom_call.1']
    #allocation7 [shape = 'u8[2048]{0}', space=vmem, size = 0x800, scoped, tag = 'output window, operand 0, single buffered']
    %7 = vsyncpa [#allocation3], 0
    %8 = vsyncpa [#allocation6], 0
    %9 = vsyncpa [#allocation4], 0
    // Predicated region
    $region2: #{tpu_custom_call.1} parent=1 // pred_check
      _
    $region3: #{tpu_custom_call.1} parent=1 // pred_check_branch
      %11 = sbr.rel (0) target = $region5
    $region4: #{tpu_custom_call.1} parent=1 // pred_region
      %s13 = ssub.s32 64, 64
      %14 = vsyncadd [#allocation3], %s13
      %s16 = sshll.u32 [#allocation2], 4
      %s17 = int_to_ptr.vmem [resolvable:$true] %s16
      %19 = dma.hbm_to_vmem [thread:$0]  %s0, 64, %s17, [#allocation3]
    $region5: #{tpu_custom_call.1} parent=1 // pred_fallthru
      _
    // Predicated region
    $region6: #{tpu_custom_call.1} parent=1 // pred_check
      _
    $region7: #{tpu_custom_call.1} parent=1 // pred_check_branch
      %21 = sbr.rel (0) target = $region9
    $region8: #{tpu_custom_call.1} parent=1 // pred_region
      %s23 = ssub.s32 3328, 3328
      %24 = vsyncadd [#allocation6], %s23
      %s25 = sshll.u32 [#allocation5], 4
      %s26 = int_to_ptr.vmem [resolvable:$true] %s25
      %31 = dma.hbm_to_vmem [thread:$0]  %s1, 3328, %s26, [#allocation6], 128, 128, 8
    $region9: #{tpu_custom_call.1} parent=1 // pred_fallthru
      _
    // Predicated region
    $region10: #{tpu_custom_call.1} parent=1 // pred_check
      _
    $region11: #{tpu_custom_call.1} parent=1 // pred_check_branch
      %33 = sbr.rel (0) target = $region13
    $region12: #{tpu_custom_call.1} parent=1 // pred_region
      %34 = dma.done [#allocation3], 64
    $region13: #{tpu_custom_call.1} parent=1 // pred_fallthru
      _
    // Predicated region
    $region14: #{tpu_custom_call.1} parent=1 // pred_check
      _
    $region15: #{tpu_custom_call.1} parent=1 // pred_check_branch
      %36 = sbr.rel (0) target = $region17
    $region16: #{tpu_custom_call.1} parent=1 // pred_region
      %37 = dma.done [#allocation6], 3328
    $region17: #{tpu_custom_call.1} parent=1 // pred_fallthru
      _
    %v38 = vld [vmem:[#allocation2] sm:$0xf]
    %v39 = vld [vmem:[#allocation5] sm:$0xff]
    %v40 = vld [vmem:[#allocation5 + $0x8] sm:$0xff]
    %v41 = vld [vmem:[#allocation5 + $0x10] sm:$0xff]
    %v42 = vld [vmem:[#allocation5 + $0x18] sm:$0xff]
    %v43 = vld [vmem:[#allocation5 + $0x20] sm:$0xff]
    %v44 = vld [vmem:[#allocation5 + $0x28] sm:$0xff]
    %v45 = vld [vmem:[#allocation5 + $0x30] sm:$0xff]
    %v46 = vld [vmem:[#allocation5 + $0x38] sm:$0xff]
    %v47 = vld [vmem:[#allocation5 + $0x40] sm:$0xff]
    %v48 = vld [vmem:[#allocation5 + $0x48] sm:$0xff]
    %v49 = vld [vmem:[#allocation5 + $0x50] sm:$0xff]
    %v50 = vld [vmem:[#allocation5 + $0x58] sm:$0xff]
    %v51 = vld [vmem:[#allocation5 + $0x60] sm:$0xff]
    %v52 = vld [vmem:[#allocation5 + $0x68] sm:$0xff]
    %v53 = vld [vmem:[#allocation5 + $0x70] sm:$0xff]
    %v54 = vld [vmem:[#allocation5 + $0x78] sm:$0xff]
    %v55 = vld [vmem:[#allocation5 + $0x80] sm:$0xff]
    %v56 = vld [vmem:[#allocation5 + $0x88] sm:$0xff]
    %v57 = vld [vmem:[#allocation5 + $0x90] sm:$0xff]
    %v58 = vld [vmem:[#allocation5 + $0x98] sm:$0xff]
    %v59 = vld [vmem:[#allocation5 + $0xa0] sm:$0xff]
    %v60 = vld [vmem:[#allocation5 + $0xa8] sm:$0xff]
    %v61 = vld [vmem:[#allocation5 + $0xb0] sm:$0xff]
    %v62 = vld [vmem:[#allocation5 + $0xb8] sm:$0xff]
    %v63 = vld [vmem:[#allocation5 + $0xc0] sm:$0x7]
    %v64 = vld [vmem:[#allocation5 + $0xc8] sm:$0x7]
    %66 = vset.pattern.permute.xlu0 0
    %67 = vperm.xlu0 %66, %v39
    %v68 = vpop.permute.xlu0 %67
    %71 = vset.pattern.permute.xlu0 0
    %72 = vperm.xlu0 %71, %v40
    %v73 = vpop.permute.xlu0 %72
    %76 = vset.pattern.permute.xlu0 0
    %77 = vperm.xlu0 %76, %v41
    %v78 = vpop.permute.xlu0 %77
    %81 = vset.pattern.permute.xlu0 0
    %82 = vperm.xlu0 %81, %v42
    %v83 = vpop.permute.xlu0 %82
    %86 = vset.pattern.permute.xlu0 0
    %87 = vperm.xlu0 %86, %v43
    %v88 = vpop.permute.xlu0 %87
    %91 = vset.pattern.permute.xlu0 0
    %92 = vperm.xlu0 %91, %v44
    %v93 = vpop.permute.xlu0 %92
    %96 = vset.pattern.permute.xlu0 0
    %97 = vperm.xlu0 %96, %v45
    %v98 = vpop.permute.xlu0 %97
    %101 = vset.pattern.permute.xlu0 0
    %102 = vperm.xlu0 %101, %v46
    %v103 = vpop.permute.xlu0 %102
    %v105 = vlaneseq
    %v106 = vshrl.u32 %v105, 7
    %v107 = vsub.s32 0, %v106
    %v108 = vrot.slane %v38, %v107
    %v109 = vmul.f32 %v68, %v108
    %v110 = vmul.f32 %v73, %v108
    %v111 = vmul.f32 %v78, %v108
    %v112 = vmul.f32 %v83, %v108
    %v113 = vmul.f32 %v88, %v108
    %v114 = vmul.f32 %v93, %v108
    %v115 = vmul.f32 %v98, %v108
    %v116 = vmul.f32 %v103, %v108
    %117 = vset.pattern.permute.xlu0 4
    %118 = vperm.xlu0 %117, %v39
    %v119 = vpop.permute.xlu0 %118
    %121 = vset.pattern.permute.xlu0 4
    %122 = vperm.xlu0 %121, %v40
    %v123 = vpop.permute.xlu0 %122
    %125 = vset.pattern.permute.xlu0 4
    %126 = vperm.xlu0 %125, %v41
    %v127 = vpop.permute.xlu0 %126
    %129 = vset.pattern.permute.xlu0 4
    %130 = vperm.xlu0 %129, %v42
    %v131 = vpop.permute.xlu0 %130
    %133 = vset.pattern.permute.xlu0 4
    %134 = vperm.xlu0 %133, %v43
    %v135 = vpop.permute.xlu0 %134
    %137 = vset.pattern.permute.xlu0 4
    %138 = vperm.xlu0 %137, %v44
    %v139 = vpop.permute.xlu0 %138
    %141 = vset.pattern.permute.xlu0 4
    %142 = vperm.xlu0 %141, %v45
    %v143 = vpop.permute.xlu0 %142
    %145 = vset.pattern.permute.xlu0 4
    %146 = vperm.xlu0 %145, %v46
    %v147 = vpop.permute.xlu0 %146
    %v149 = vadd.f32 %v109, %v119
    %v150 = vadd.f32 %v110, %v123
    %v151 = vadd.f32 %v111, %v127
    %v152 = vadd.f32 %v112, %v131
    %v153 = vadd.f32 %v113, %v135
    %v154 = vadd.f32 %v114, %v139
    %v155 = vadd.f32 %v115, %v143
    %v156 = vadd.f32 %v116, %v147
    %157 = vset.pattern.permute.xlu0 1
    %158 = vperm.xlu0 %157, %v39
    %v159 = vpop.permute.xlu0 %158
    %161 = vset.pattern.permute.xlu0 1
    %162 = vperm.xlu0 %161, %v40
    %v163 = vpop.permute.xlu0 %162
    %165 = vset.pattern.permute.xlu0 1
    %166 = vperm.xlu0 %165, %v41
    %v167 = vpop.permute.xlu0 %166
    %169 = vset.pattern.permute.xlu0 1
    %170 = vperm.xlu0 %169, %v42
    %v171 = vpop.permute.xlu0 %170
    %173 = vset.pattern.permute.xlu0 1
    %174 = vperm.xlu0 %173, %v43
    %v175 = vpop.permute.xlu0 %174
    %177 = vset.pattern.permute.xlu0 1
    %178 = vperm.xlu0 %177, %v44
    %v179 = vpop.permute.xlu0 %178
    %181 = vset.pattern.permute.xlu0 1
    %182 = vperm.xlu0 %181, %v45
    %v183 = vpop.permute.xlu0 %182
    %185 = vset.pattern.permute.xlu0 1
    %186 = vperm.xlu0 %185, %v46
    %v187 = vpop.permute.xlu0 %186
    %v189 = vlaneseq
    %v190 = vshrl.u32 %v189, 7
    %v191 = vsub.s32 1, %v190
    %v192 = vrot.slane %v38, %v191
    %v193 = vmul.f32 %v159, %v192
    %v194 = vmul.f32 %v163, %v192
    %v195 = vmul.f32 %v167, %v192
    %v196 = vmul.f32 %v171, %v192
    %v197 = vmul.f32 %v175, %v192
    %v198 = vmul.f32 %v179, %v192
    %v199 = vmul.f32 %v183, %v192
    %v200 = vmul.f32 %v187, %v192
    %v201 = vadd.f32 %v149, %v193
    %v202 = vadd.f32 %v150, %v194
    %v203 = vadd.f32 %v151, %v195
    %v204 = vadd.f32 %v152, %v196
    %v205 = vadd.f32 %v153, %v197
    %v206 = vadd.f32 %v154, %v198
    %v207 = vadd.f32 %v155, %v199
    %v208 = vadd.f32 %v156, %v200
    %209 = vset.pattern.permute.xlu0 2
    %210 = vperm.xlu0 %209, %v39
    %v211 = vpop.permute.xlu0 %210
    %213 = vset.pattern.permute.xlu0 2
    %214 = vperm.xlu0 %213, %v40
    %v215 = vpop.permute.xlu0 %214
    %217 = vset.pattern.permute.xlu0 2
    %218 = vperm.xlu0 %217, %v41
    %v219 = vpop.permute.xlu0 %218
    %221 = vset.pattern.permute.xlu0 2
    %222 = vperm.xlu0 %221, %v42
    %v223 = vpop.permute.xlu0 %222
    %225 = vset.pattern.permute.xlu0 2
    %226 = vperm.xlu0 %225, %v43
    %v227 = vpop.permute.xlu0 %226
    %229 = vset.pattern.permute.xlu0 2
    %230 = vperm.xlu0 %229, %v44
    %v231 = vpop.permute.xlu0 %230
    %233 = vset.pattern.permute.xlu0 2
    %234 = vperm.xlu0 %233, %v45
    %v235 = vpop.permute.xlu0 %234
    %237 = vset.pattern.permute.xlu0 2
    %238 = vperm.xlu0 %237, %v46
    %v239 = vpop.permute.xlu0 %238
    %v241 = vlaneseq
    %v242 = vshrl.u32 %v241, 7
    %v243 = vsub.s32 2, %v242
    %v244 = vrot.slane %v38, %v243
    %v245 = vmul.f32 %v211, %v244
    %v246 = vmul.f32 %v215, %v244
    %v247 = vmul.f32 %v219, %v244
    %v248 = vmul.f32 %v223, %v244
    %v249 = vmul.f32 %v227, %v244
    %v250 = vmul.f32 %v231, %v244
    %v251 = vmul.f32 %v235, %v244
    %v252 = vmul.f32 %v239, %v244
    %v253 = vadd.f32 %v201, %v245
    %v254 = vadd.f32 %v202, %v246
    %v255 = vadd.f32 %v203, %v247
    %v256 = vadd.f32 %v204, %v248
    %v257 = vadd.f32 %v205, %v249
    %v258 = vadd.f32 %v206, %v250
    %v259 = vadd.f32 %v207, %v251
    %v260 = vadd.f32 %v208, %v252
    %261 = vset.pattern.permute.xlu0 3
    %262 = vperm.xlu0 %261, %v39
    %v263 = vpop.permute.xlu0 %262
    %265 = vset.pattern.permute.xlu0 3
    %266 = vperm.xlu0 %265, %v40
    %v267 = vpop.permute.xlu0 %266
    %269 = vset.pattern.permute.xlu0 3
    %270 = vperm.xlu0 %269, %v41
    %v271 = vpop.permute.xlu0 %270
    %273 = vset.pattern.permute.xlu0 3
    %274 = vperm.xlu0 %273, %v42
    %v275 = vpop.permute.xlu0 %274
    %277 = vset.pattern.permute.xlu0 3
    %278 = vperm.xlu0 %277, %v43
    %v279 = vpop.permute.xlu0 %278
    %281 = vset.pattern.permute.xlu0 3
    %282 = vperm.xlu0 %281, %v44
    %v283 = vpop.permute.xlu0 %282
    %285 = vset.pattern.permute.xlu0 3
    %286 = vperm.xlu0 %285, %v45
    %v287 = vpop.permute.xlu0 %286
    %289 = vset.pattern.permute.xlu0 3
    %290 = vperm.xlu0 %289, %v46
    %v291 = vpop.permute.xlu0 %290
    %v293 = vlaneseq
    %v294 = vshrl.u32 %v293, 7
    %v295 = vsub.s32 3, %v294
    %v296 = vrot.slane %v38, %v295
    %v297 = vmul.f32 %v263, %v296
    %v298 = vmul.f32 %v267, %v296
    %v299 = vmul.f32 %v271, %v296
    %v300 = vmul.f32 %v275, %v296
    %v301 = vmul.f32 %v279, %v296
    %v302 = vmul.f32 %v283, %v296
    %v303 = vmul.f32 %v287, %v296
    %v304 = vmul.f32 %v291, %v296
    %v305 = vadd.f32 %v253, %v297
    %v306 = vadd.f32 %v254, %v298
    %v307 = vadd.f32 %v255, %v299
    %v308 = vadd.f32 %v256, %v300
    %v309 = vadd.f32 %v257, %v301
    %v310 = vadd.f32 %v258, %v302
    %v311 = vadd.f32 %v259, %v303
    %v312 = vadd.f32 %v260, %v304
    %v313 = vmax.f32 %v305, 0.0
    %v314 = vmax.f32 %v306, 0.0
    %v315 = vmax.f32 %v307, 0.0
    %v316 = vmax.f32 %v308, 0.0
    %v317 = vmax.f32 %v309, 0.0
    %v318 = vmax.f32 %v310, 0.0
    %v319 = vmax.f32 %v311, 0.0
    %v320 = vmax.f32 %v312, 0.0
    %322 = vset.pattern.permute.xlu0 64
    %323 = vperm.xlu0 %322, %v47
    %v324 = vpop.permute.xlu0 %323
    %327 = vset.pattern.permute.xlu0 64
    %328 = vperm.xlu0 %327, %v48
    %v329 = vpop.permute.xlu0 %328
    %332 = vset.pattern.permute.xlu0 64
    %333 = vperm.xlu0 %332, %v49
    %v334 = vpop.permute.xlu0 %333
    %337 = vset.pattern.permute.xlu0 64
    %338 = vperm.xlu0 %337, %v50
    %v339 = vpop.permute.xlu0 %338
    %342 = vset.pattern.permute.xlu0 64
    %343 = vperm.xlu0 %342, %v51
    %v344 = vpop.permute.xlu0 %343
    %347 = vset.pattern.permute.xlu0 64
    %348 = vperm.xlu0 %347, %v52
    %v349 = vpop.permute.xlu0 %348
    %352 = vset.pattern.permute.xlu0 64
    %353 = vperm.xlu0 %352, %v53
    %v354 = vpop.permute.xlu0 %353
    %357 = vset.pattern.permute.xlu0 64
    %358 = vperm.xlu0 %357, %v54
    %v359 = vpop.permute.xlu0 %358
    %362 = vset.pattern.permute.xlu0 64
    %363 = vperm.xlu0 %362, %v55
    %v364 = vpop.permute.xlu0 %363
    %367 = vset.pattern.permute.xlu0 64
    %368 = vperm.xlu0 %367, %v56
    %v369 = vpop.permute.xlu0 %368
    %372 = vset.pattern.permute.xlu0 64
    %373 = vperm.xlu0 %372, %v57
    %v374 = vpop.permute.xlu0 %373
    %377 = vset.pattern.permute.xlu0 64
    %378 = vperm.xlu0 %377, %v58
    %v379 = vpop.permute.xlu0 %378
    %382 = vset.pattern.permute.xlu0 64
    %383 = vperm.xlu0 %382, %v59
    %v384 = vpop.permute.xlu0 %383
    %387 = vset.pattern.permute.xlu0 64
    %388 = vperm.xlu0 %387, %v60
    %v389 = vpop.permute.xlu0 %388
    %392 = vset.pattern.permute.xlu0 64
    %393 = vperm.xlu0 %392, %v61
    %v394 = vpop.permute.xlu0 %393
    %397 = vset.pattern.permute.xlu0 64
    %398 = vperm.xlu0 %397, %v62
    %v399 = vpop.permute.xlu0 %398
    %vm401 = vcmask 523264
    %v402 = vsel %vm401, %v47, 0
    %v404 = vsel %vm401, %v48, 0
    %v406 = vsel %vm401, %v49, 0
    %v408 = vsel %vm401, %v50, 0
    %v410 = vsel %vm401, %v51, 0
    %v412 = vsel %vm401, %v52, 0
    %v414 = vsel %vm401, %v53, 0
    %v416 = vsel %vm401, %v54, 0
    %v418 = vsel %vm401, %v55, 0
    %v420 = vsel %vm401, %v56, 0
    %v422 = vsel %vm401, %v57, 0
    %v424 = vsel %vm401, %v58, 0
    %v426 = vsel %vm401, %v59, 0
    %v428 = vsel %vm401, %v60, 0
    %v430 = vsel %vm401, %v61, 0
    %v432 = vsel %vm401, %v62, 0
    %434 = vmatprep.subr.mxu0 0.0
    %435 = vmatpush1.msra.mxu0 %v313
    %436 = vmatprep.subr.mxu0 0.0
    %437 = vmatpush1.msra.mxu0 %v314
    %438 = vmatprep.subr.mxu0 0.0
    %439 = vmatpush1.msra.mxu0 %v315
    %440 = vmatprep.subr.mxu0 0.0
    %441 = vmatpush1.msra.mxu0 %v316
    %442 = vmatprep.subr.mxu0 0.0
    %443 = vmatpush1.msra.mxu0 %v317
    %444 = vmatprep.subr.mxu0 0.0
    %445 = vmatpush1.msra.mxu0 %v318
    %446 = vmatprep.subr.mxu0 0.0
    %447 = vmatpush1.msra.mxu0 %v319
    %448 = vmatprep.subr.mxu0 0.0
    %449 = vmatpush1.msra.mxu0 %v320
    %450 = vmatprep.subr.mxu0 0.0
    %451 = vmatpush1.msra.mxu0 0.0
    %452 = vmatprep.subr.mxu0 0.0
    %453 = vmatpush1.msra.mxu0 0.0
    %454 = vmatprep.subr.mxu0 0.0
    %455 = vmatpush1.msra.mxu0 0.0
    %456 = vmatprep.subr.mxu0 0.0
    %457 = vmatpush1.msra.mxu0 0.0
    %458 = vmatprep.subr.mxu0 0.0
    %459 = vmatpush1.msra.mxu0 0.0
    %460 = vmatprep.subr.mxu0 0.0
    %461 = vmatpush1.msra.mxu0 0.0
    %462 = vmatprep.subr.mxu0 0.0
    %463 = vmatpush1.msra.mxu0 0.0
    %464 = vmatprep.subr.mxu0 0.0
    %465 = vmatpush1.msra.mxu0 0.0
    %466 = vmatprep.subr.mxu0 0.0
    %467 = vmatpush1.msra.mxu0 0.0
    %468 = vmatprep.subr.mxu0 0.0
    %469 = vmatpush1.msra.mxu0 0.0
    %470 = vmatprep.subr.mxu0 0.0
    %471 = vmatpush1.msra.mxu0 0.0
    %472 = vmatprep.subr.mxu0 0.0
    %473 = vmatpush1.msra.mxu0 0.0
    %474 = vmatprep.subr.mxu0 0.0
    %475 = vmatpush1.msra.mxu0 0.0
    %476 = vmatprep.subr.mxu0 0.0
    %477 = vmatpush1.msra.mxu0 0.0
    %478 = vmatprep.subr.mxu0 0.0
    %479 = vmatpush1.msra.mxu0 0.0
    %480 = vmatprep.subr.mxu0 0.0
    %481 = vmatpush1.msra.mxu0 0.0
    %482 = vmatprep.subr.mxu0 0.0
    %483 = vmatpush1.msra.mxu0 0.0
    %484 = vmatprep.subr.mxu0 0.0
    %485 = vmatpush1.msra.mxu0 0.0
    %486 = vmatprep.subr.mxu0 0.0
    %487 = vmatpush1.msra.mxu0 0.0
    %488 = vmatprep.subr.mxu0 0.0
    %489 = vmatpush1.msra.mxu0 0.0
    %490 = vmatprep.subr.mxu0 0.0
    %491 = vmatpush1.msra.mxu0 0.0
    %492 = vmatprep.subr.mxu0 0.0
    %493 = vmatpush1.msra.mxu0 0.0
    %494 = vmatprep.subr.mxu0 0.0
    %495 = vmatpush1.msra.mxu0 0.0
    %496 = vmatprep.subr.mxu0 0.0
    %497 = vmatpush1.msra.mxu0 0.0
    %498 = vmatprep.mubr.f32.mxu0 0.0
    %499 = vmatmul.mubr.f32.gmra.mrb[0].mxu0 %v402
    %v500 = vpop.f32.mrb[0].mxu0
    %v501 = vadd.f32 %v324, %v500
    %v502 = vpop.f32.mrb[0].mxu0
    %503 = vmatprep.mubr.f32.mxu0 0.0
    %504 = vmatmul.mubr.f32.gmra.mrb[0].mxu0 %v404
    %v505 = vpop.f32.mrb[0].mxu0
    %v506 = vadd.f32 %v329, %v505
    %v507 = vpop.f32.mrb[0].mxu0
    %508 = vmatprep.mubr.f32.mxu0 0.0
    %509 = vmatmul.mubr.f32.gmra.mrb[0].mxu0 %v406
    %v510 = vpop.f32.mrb[0].mxu0
    %v511 = vadd.f32 %v334, %v510
    %v512 = vpop.f32.mrb[0].mxu0
    %513 = vmatprep.mubr.f32.mxu0 0.0
    %514 = vmatmul.mubr.f32.gmra.mrb[0].mxu0 %v408
    %v515 = vpop.f32.mrb[0].mxu0
    %v516 = vadd.f32 %v339, %v515
    %v517 = vpop.f32.mrb[0].mxu0
    %518 = vmatprep.mubr.f32.mxu0 0.0
    %519 = vmatmul.mubr.f32.gmra.mrb[0].mxu0 %v410
    %v520 = vpop.f32.mrb[0].mxu0
    %v521 = vadd.f32 %v344, %v520
    %v522 = vpop.f32.mrb[0].mxu0
    %523 = vmatprep.mubr.f32.mxu0 0.0
    %524 = vmatmul.mubr.f32.gmra.mrb[0].mxu0 %v412
    %v525 = vpop.f32.mrb[0].mxu0
    %v526 = vadd.f32 %v349, %v525
    %v527 = vpop.f32.mrb[0].mxu0
    %528 = vmatprep.mubr.f32.mxu0 0.0
    %529 = vmatmul.mubr.f32.gmra.mrb[0].mxu0 %v414
    %v530 = vpop.f32.mrb[0].mxu0
    %v531 = vadd.f32 %v354, %v530
    %v532 = vpop.f32.mrb[0].mxu0
    %533 = vmatprep.mubr.f32.mxu0 0.0
    %534 = vmatmul.mubr.f32.gmra.mrb[0].mxu0 %v416
    %v535 = vpop.f32.mrb[0].mxu0
    %v536 = vadd.f32 %v359, %v535
    %v537 = vpop.f32.mrb[0].mxu0
    %538 = vmatprep.mubr.f32.mxu0 0.0
    %539 = vmatmul.mubr.f32.gmra.mrb[0].mxu0 %v418
    %v540 = vpop.f32.mrb[0].mxu0
    %v541 = vadd.f32 %v364, %v540
    %v542 = vpop.f32.mrb[0].mxu0
    %543 = vmatprep.mubr.f32.mxu0 0.0
    %544 = vmatmul.mubr.f32.gmra.mrb[0].mxu0 %v420
    %v545 = vpop.f32.mrb[0].mxu0
    %v546 = vadd.f32 %v369, %v545
    %v547 = vpop.f32.mrb[0].mxu0
    %548 = vmatprep.mubr.f32.mxu0 0.0
    %549 = vmatmul.mubr.f32.gmra.mrb[0].mxu0 %v422
    %v550 = vpop.f32.mrb[0].mxu0
    %v551 = vadd.f32 %v374, %v550
    %v552 = vpop.f32.mrb[0].mxu0
    %553 = vmatprep.mubr.f32.mxu0 0.0
    %554 = vmatmul.mubr.f32.gmra.mrb[0].mxu0 %v424
    %v555 = vpop.f32.mrb[0].mxu0
    %v556 = vadd.f32 %v379, %v555
    %v557 = vpop.f32.mrb[0].mxu0
    %558 = vmatprep.mubr.f32.mxu0 0.0
    %559 = vmatmul.mubr.f32.gmra.mrb[0].mxu0 %v426
    %v560 = vpop.f32.mrb[0].mxu0
    %v561 = vadd.f32 %v384, %v560
    %v562 = vpop.f32.mrb[0].mxu0
    %563 = vmatprep.mubr.f32.mxu0 0.0
    %564 = vmatmul.mubr.f32.gmra.mrb[0].mxu0 %v428
    %v565 = vpop.f32.mrb[0].mxu0
    %v566 = vadd.f32 %v389, %v565
    %v567 = vpop.f32.mrb[0].mxu0
    %568 = vmatprep.mubr.f32.mxu0 0.0
    %569 = vmatmul.mubr.f32.gmra.mrb[0].mxu0 %v430
    %v570 = vpop.f32.mrb[0].mxu0
    %v571 = vadd.f32 %v394, %v570
    %v572 = vpop.f32.mrb[0].mxu0
    %573 = vmatprep.mubr.f32.mxu0 0.0
    %574 = vmatmul.mubr.f32.gmra.mrb[0].mxu0 %v432
    %v575 = vpop.f32.mrb[0].mxu0
    %v576 = vadd.f32 %v399, %v575
    %v577 = vpop.f32.mrb[0].mxu0
    %578 = vdwg.mxu0
    %v579 = vmax.f32 %v501, 0.0
    %v580 = vmax.f32 %v506, 0.0
    %v581 = vmax.f32 %v511, 0.0
    %v582 = vmax.f32 %v516, 0.0
    %v583 = vmax.f32 %v521, 0.0
    %v584 = vmax.f32 %v526, 0.0
    %v585 = vmax.f32 %v531, 0.0
    %v586 = vmax.f32 %v536, 0.0
    %v587 = vmax.f32 %v541, 0.0
    %v588 = vmax.f32 %v546, 0.0
    %v589 = vmax.f32 %v551, 0.0
    %v590 = vmax.f32 %v556, 0.0
    %v591 = vmax.f32 %v561, 0.0
    %v592 = vmax.f32 %v566, 0.0
    %v593 = vmax.f32 %v571, 0.0
    %v594 = vmax.f32 %v576, 0.0
    %596 = vset.pattern.permute.xlu0 0
    %597 = vperm.xlu0 %596, %v64
    %v598 = vpop.permute.xlu0 %597
    %600 = vmatprep.subr.mxu0 0.0
    %601 = vmatpush1.msra.mxu0 %v579
    %602 = vmatprep.subr.mxu0 0.0
    %603 = vmatpush1.msra.mxu0 %v580
    %604 = vmatprep.subr.mxu0 0.0
    %605 = vmatpush1.msra.mxu0 %v581
    %606 = vmatprep.subr.mxu0 0.0
    %607 = vmatpush1.msra.mxu0 %v582
    %608 = vmatprep.subr.mxu0 0.0
    %609 = vmatpush1.msra.mxu0 %v583
    %610 = vmatprep.subr.mxu0 0.0
    %611 = vmatpush1.msra.mxu0 %v584
    %612 = vmatprep.subr.mxu0 0.0
    %613 = vmatpush1.msra.mxu0 %v585
    %614 = vmatprep.subr.mxu0 0.0
    %615 = vmatpush1.msra.mxu0 %v586
    %616 = vmatprep.subr.mxu0 0.0
    %617 = vmatpush1.msra.mxu0 %v587
    %618 = vmatprep.subr.mxu0 0.0
    %619 = vmatpush1.msra.mxu0 %v588
    %620 = vmatprep.subr.mxu0 0.0
    %621 = vmatpush1.msra.mxu0 %v589
    %622 = vmatprep.subr.mxu0 0.0
    %623 = vmatpush1.msra.mxu0 %v590
    %624 = vmatprep.subr.mxu0 0.0
    %625 = vmatpush1.msra.mxu0 %v591
    %626 = vmatprep.subr.mxu0 0.0
    %627 = vmatpush1.msra.mxu0 %v592
    %628 = vmatprep.subr.mxu0 0.0
    %629 = vmatpush1.msra.mxu0 %v593
    %630 = vmatprep.subr.mxu0 0.0
    %631 = vmatpush1.msra.mxu0 %v594
    %632 = vmatprep.subr.mxu0 0.0
    %633 = vmatpush1.msra.mxu0 0.0
    %634 = vmatprep.subr.mxu0 0.0
    %635 = vmatpush1.msra.mxu0 0.0
    %636 = vmatprep.subr.mxu0 0.0
    %637 = vmatpush1.msra.mxu0 0.0
    %638 = vmatprep.subr.mxu0 0.0
    %639 = vmatpush1.msra.mxu0 0.0
    %640 = vmatprep.subr.mxu0 0.0
    %641 = vmatpush1.msra.mxu0 0.0
    %642 = vmatprep.subr.mxu0 0.0
    %643 = vmatpush1.msra.mxu0 0.0
    %644 = vmatprep.subr.mxu0 0.0
    %645 = vmatpush1.msra.mxu0 0.0
    %646 = vmatprep.subr.mxu0 0.0
    %647 = vmatpush1.msra.mxu0 0.0
    %648 = vmatprep.subr.mxu0 0.0
    %649 = vmatpush1.msra.mxu0 0.0
    %650 = vmatprep.subr.mxu0 0.0
    %651 = vmatpush1.msra.mxu0 0.0
    %652 = vmatprep.subr.mxu0 0.0
    %653 = vmatpush1.msra.mxu0 0.0
    %654 = vmatprep.subr.mxu0 0.0
    %655 = vmatpush1.msra.mxu0 0.0
    %656 = vmatprep.subr.mxu0 0.0
    %657 = vmatpush1.msra.mxu0 0.0
    %658 = vmatprep.subr.mxu0 0.0
    %659 = vmatpush1.msra.mxu0 0.0
    %660 = vmatprep.subr.mxu0 0.0
    %661 = vmatpush1.msra.mxu0 0.0
    %662 = vmatprep.subr.mxu0 0.0
    %663 = vmatpush1.msra.mxu0 0.0
    %664 = vmatprep.mubr.f32.mxu0 0.0
    %665 = vmatmul.mubr.f32.gmra.mrb[0].mxu0 %v63
    %v666 = vpop.f32.mrb[0].mxu0
    %v667 = vadd.f32 %v598, %v666
    %v668 = vpop.f32.mrb[0].mxu0
    %669 = vdwg.mxu0
    %670 = vst [vmem:[#allocation7] sm:$0x7] %v667
    // Predicated region
    $region18: #{tpu_custom_call.1} parent=1 // pred_check
      _
    $region19: #{tpu_custom_call.1} parent=1 // pred_check_branch
      %672 = sbr.rel (0) target = $region21
    $region20: #{tpu_custom_call.1} parent=1 // pred_region
      %s674 = ssub.s32 64, 64
      %675 = vsyncadd [#allocation4], %s674
      %s677 = sshll.u32 [#allocation7], 4
      %s678 = int_to_ptr.vmem [resolvable:$true] %s677
      %680 = dma.vmem_to_hbm [thread:$0]  %s678, 64, %s2, [#allocation4]
    $region21: #{tpu_custom_call.1} parent=1 // pred_fallthru
      _
    // Predicated region
    $region22: #{tpu_custom_call.1} parent=1 // pred_check
      _
    $region23: #{tpu_custom_call.1} parent=1 // pred_check_branch
      %682 = sbr.rel (0) target = $region25
    $region24: #{tpu_custom_call.1} parent=1 // pred_region
      %683 = dma.done [#allocation4], 64
    $region25: #{tpu_custom_call.1} parent=1 // pred_fallthru
      _
    %684 = vsyncpa [#allocation3], 1
    %685 = vsyncpa [#allocation6], 1
    %686 = vsyncpa [#allocation4], 1

</llo_original>
